<compile_context>
chip_gen: v6e
topology: v6e:2x2x1
jax: 0.10.0
libtpu: 0.0.40
codegen_flags: <defaults>
</compile_context>

<pallas_src>
import functools

import jax
import jax.numpy as jnp
from jax.experimental import pallas as pl
from jax.experimental.pallas import tpu as pltpu

HIGHEST = jax.lax.Precision.HIGHEST

_SINGLE_BLOCK_BYTES = 6 * 1024 * 1024     # whole-problem-in-VMEM fast path
_SINGLE_BLOCK_W_BYTES = 4 * 1024 * 1024   # init-time padding decision
_FEAT_RESIDENT_BYTES = 4 * 1024 * 1024    # full-K feature residency (x2 buffers)
_VMEM_LIMIT = 32 * 1024 * 1024            # >= footprint on all of v5e/v6e/v7x


def _round_up(x, m):
    return ((x + m - 1) // m) * m


def _pick_tile(total, candidates=(512, 256, 128)):
    for c in candidates:
        if total % c == 0:
            return c
    return total


def _pad_dims(d_feat, n_out):
    """Padded (K, N).  Small problems stay 128-aligned (single-block path);
    large problems pad K to a 512 multiple so the tiled path gets 512 tiles."""
    k128 = _round_up(d_feat, 128)
    n128 = _round_up(n_out, 128)
    if k128 * n128 * 2 <= _SINGLE_BLOCK_W_BYTES:
        return k128, n128
    return _round_up(d_feat, 512), n128


# ----------------------------- Pallas kernels ------------------------------

def _taylor_single_block_kernel(f_ref, w_ref, bias_ref, o_ref):
    # Whole problem in VMEM: one MXU pass, bias added on the f32 result.
    o_ref[...] = (jnp.dot(f_ref[...], w_ref[...],
                          preferred_element_type=jnp.float32)
                  + bias_ref[...])


def _taylor_tiled_kernel(f_ref, w_ref, bias_ref, o_ref, *, tk, feat_resident):
    k = pl.program_id(1)

    @pl.when(k == 0)
    def _init():
        # The f32 output block is the accumulator (its BlockSpec index is
        # constant across the k axis, so it stays resident in VMEM); seed it
        # with the bias so no finalize step is needed.
        o_ref[...] = jnp.broadcast_to(bias_ref[...], o_ref.shape)

    if feat_resident:
        start = pl.multiple_of(k * tk, tk)
        f = f_ref[:, pl.ds(start, tk)]
    else:
        f = f_ref[...]
    o_ref[...] += jnp.dot(f, w_ref[...], preferred_element_type=jnp.float32)


def taylor_fused_matmul(feat, w, bias):
    """out = feat @ w + bias with
         feat : (M, K)  bf16/f32  quadratic features (padded, zeros in pad)
         w    : (K, N)  bf16/f32  folded heads + ConcatHeads + output linear
         bias : (1, N)  f32
       Small problems run as one grid step with full-extent blocks; large ones
       tile K as the reduction axis ("arbitrary") accumulating straight into
       the f32 output block, with N tiled "parallel" (v7x megacore)."""
    M, K = feat.shape
    K2, N = w.shape
    assert K == K2 and bias.shape == (1, N)
    assert M % 8 == 0 and K % 128 == 0 and N % 128 == 0

    feat_bytes = M * K * feat.dtype.itemsize
    w_bytes = K * N * w.dtype.itemsize
    out_bytes = M * N * 4

    # -------- single-block fast path (no grid overhead, no accumulator) -----
    if w_bytes + 2 * feat_bytes + 2 * out_bytes <= _SINGLE_BLOCK_BYTES:
        return pl.pallas_call(
            _taylor_single_block_kernel,
            out_shape=jax.ShapeDtypeStruct((M, N), jnp.float32),
            grid=(1,),
            in_specs=[pl.BlockSpec((M, K), lambda i: (0, 0)),
                      pl.BlockSpec((K, N), lambda i: (0, 0)),
                      pl.BlockSpec((1, N), lambda i: (0, 0))],
            out_specs=pl.BlockSpec((M, N), lambda i: (0, 0)),
            compiler_params=pltpu.CompilerParams(
                vmem_limit_bytes=_VMEM_LIMIT),
        )(feat, w, bias)

    # ------------------------------- tiled path -----------------------------
    tk = _pick_tile(K)          # init pads K to a 512 multiple -> tk = 512
    tn = _pick_tile(N)
    # v7x has 2 TensorCores: make the "parallel" N axis have >= 2 blocks when
    # N allows it (no effect on v5e/v6e beyond slightly smaller weight tiles).
    if N // tn < 2:
        for c in (512, 256, 128):
            if N % c == 0 and N // c >= 2:
                tn = c
                break

    # If the feature slab is small, keep it fully resident (fetched once)
    # instead of re-streaming it for every N tile.
    feat_resident = feat_bytes <= _FEAT_RESIDENT_BYTES
    if feat_resident:
        f_spec = pl.BlockSpec((M, K), lambda n, k: (0, 0))
    else:
        f_spec = pl.BlockSpec((M, tk), lambda n, k: (0, k))

    kernel = functools.partial(_taylor_tiled_kernel, tk=tk,
                               feat_resident=feat_resident)
    return pl.pallas_call(
        kernel,
        out_shape=jax.ShapeDtypeStruct((M, N), jnp.float32),
        grid=(N // tn, K // tk),
        in_specs=[f_spec,
                  pl.BlockSpec((tk, tn), lambda n, k: (k, n)),
                  pl.BlockSpec((1, tn), lambda n, k: (0, n))],
        out_specs=pl.BlockSpec((M, tn), lambda n, k: (0, n)),
        compiler_params=pltpu.CompilerParams(
            dimension_semantics=("parallel", "arbitrary"),
            vmem_limit_bytes=_VMEM_LIMIT),
    )(feat, w, bias)


# ------------------------------- params ------------------------------------

def init_params(key, input_features, d_model, nhead, output_features,
                sequence_length, *, weight_dtype=jnp.bfloat16):
    S, F, OF = sequence_length, input_features, output_features
    in_dim = S * F
    d_feat = in_dim + (in_dim + in_dim ** 2) // 2
    h_out = S * d_model
    keys = jax.random.split(key, 2 * nhead + 2)

    # NOTE: torch's copy.deepcopy shares identical init across heads; here each
    # head gets its own deterministic init (forward semantics are identical).
    bound = 1.0 / (d_feat ** 0.5)
    head_w = jnp.stack([jax.random.uniform(keys[2 * h], (d_feat, h_out),
                                           jnp.float32, -bound, bound)
                        for h in range(nhead)])                  # (H, d_feat, S*dm)
    head_b = jnp.stack([jax.random.uniform(keys[2 * h + 1], (h_out,),
                                           jnp.float32, -bound, bound)
                        for h in range(nhead)])                  # (H, S*dm)

    cat_dim = nhead * d_model
    bound_o = 1.0 / (cat_dim ** 0.5)
    w_out = jax.random.uniform(keys[-2], (cat_dim, OF), jnp.float32,
                               -bound_o, bound_o)
    b_out = jax.random.uniform(keys[-1], (OF,), jnp.float32, -bound_o, bound_o)

    # ---- fold heads + ConcatHeads + output linear into ONE matmul ----------
    # out[b,s,o] = sum_{h,d} (feat[b] @ W_h[:, s*dm+d] + b_h[s*dm+d])
    #              * w_out[h*dm+d, o] + b_out[o]
    Wk = head_w.reshape(nhead, d_feat, S, d_model)               # (h, k, s, d)
    bk = head_b.reshape(nhead, S, d_model)                       # (h, s, d)
    wo = w_out.reshape(nhead, d_model, OF)                       # (h, d, o)
    W_comb = jnp.einsum("hksd,hdo->kso", Wk, wo,
                        precision=HIGHEST).reshape(d_feat, S * OF)
    b_comb = (jnp.einsum("hsd,hdo->so", bk, wo, precision=HIGHEST)
              + b_out[None, :]).reshape(1, S * OF)

    # ---- pad K/N lane-dense (512-multiple K when the tiled path is used) ---
    n_out = S * OF
    K_pad, N_pad = _pad_dims(d_feat, n_out)
    W_pad = jnp.zeros((K_pad, N_pad), jnp.float32).at[:d_feat, :n_out].set(W_comb)
    b_pad = jnp.zeros((1, N_pad), jnp.float32).at[:, :n_out].set(b_comb)

    # ---- gather indices: feat[k] = xf_aug[a_idx[k]] * xf_aug[b_idx[k]] -----
    # xf_aug = [xf, 1]; the linear part multiplies by the appended 1, the
    # quadratic part is the triu outer product.  Padded feature entries are
    # written as explicit zeros in the wrapper (quantization-safe padding).
    iu_r, iu_c = jnp.triu_indices(in_dim)
    a_idx = jnp.concatenate([jnp.arange(in_dim, dtype=jnp.int32),
                             iu_r.astype(jnp.int32)])
    b_idx = jnp.concatenate([jnp.full((in_dim,), in_dim, jnp.int32),
                             iu_c.astype(jnp.int32)])

    return dict(
        W_q=W_pad.astype(weight_dtype),   # streamed weight (bf16: mem-bound path)
        b_q=b_pad,                        # bias stays f32
        a_idx=a_idx, b_idx=b_idx,
        # full-precision copies only for the reference / folding check
        ref=dict(head_w=head_w, head_b=head_b, w_out=w_out, b_out=b_out,
                 W_comb=W_comb, b_comb=b_comb),
    )


# ------------------------------- forward -----------------------------------

@functools.partial(jax.jit, static_argnames=("output_features",))
def taylor_self_attention(params, x, *, output_features):
    B, S, F = x.shape
    in_dim = S * F
    d_feat = params["a_idx"].shape[0]
    K_pad = params["W_q"].shape[0]

    xf = x.reshape(B, in_dim)
    xf_aug = jnp.concatenate([xf, jnp.ones((B, 1), xf.dtype)], axis=1)
    # The (B, in_dim, in_dim) outer product never exists: gather the two factor
    # rows from the tiny (B, in_dim+1) table and multiply in f32, then cast
    # ONCE to the weight dtype so only one activation stream enters the kernel.
    # TODO(synk): the triu index gather itself stays in JAX glue; doing it per
    # K-tile inside the kernel would need an in-kernel lane gather.
    A = jnp.take(xf_aug, params["a_idx"], axis=1)                # (B, d_feat)
    Bm = jnp.take(xf_aug, params["b_idx"], axis=1)               # (B, d_feat)
    feat = (A * Bm).astype(params["W_q"].dtype)

    M_pad = _round_up(B, 8)                                      # sublane multiple
    feat_p = jnp.zeros((M_pad, K_pad), feat.dtype).at[:B, :d_feat].set(feat)

    out = taylor_fused_matmul(feat_p, params["W_q"], params["b_q"])
    return out[:B, :S * output_features].reshape(B, S, output_features)


# ------------------------------- reference ---------------------------------

def quadratic_features_ref(x):
    B, S, F = x.shape
    in_dim = S * F
    xf = x.reshape(B, in_dim)
    iu_r, iu_c = jnp.triu_indices(in_dim)
    outer = xf[:, :, None] * xf[:, None, :]
    return jnp.concatenate([xf, outer[:, iu_r, iu_c]], axis=-1)   # (B, d_feat)


def reference(params, x, *, d_model, nhead, output_features):
    """Pure-JAX f32 emulation of TaylorSelfAttentionModule (PyTorch spec)."""
    B, S, F = x.shape
    feat = quadratic_features_ref(x)
    heads = []
    for h in range(nhead):
        hf = jnp.dot(feat, params["ref"]["head_w"][h], precision=HIGHEST)
        hf = hf + params["ref"]["head_b"][h]
        heads.append(hf.reshape(B, S, d_model))
    concat = jnp.concatenate(heads, axis=-1)                       # (B, S, H*dm)
    out = jnp.dot(concat.reshape(B * S, nhead * d_model),
                  params["ref"]["w_out"], precision=HIGHEST) + params["ref"]["b_out"]
    return out.reshape(B, S, output_features)


# --------------------------------- test -------------------------------------

def _run_case(key, *, batch, seq, feat_in, d_model, nhead, out_feat, tol):
    kx, kp = jax.random.split(key)
    x = jax.random.normal(kx, (batch, seq, feat_in), dtype=jnp.float32)
    params = init_params(kp, feat_in, d_model, nhead, out_feat, seq)

    out = jax.block_until_ready(
        taylor_self_attention(params, x, output_features=out_feat))

    # PyTorch-semantics f32 reference + folding sanity check (fold is exact).
    ref = reference(params, x, d_model=d_model, nhead=nhead,
                    output_features=out_feat)
    featq = quadratic_features_ref(x)
    folded = (jnp.dot(featq, params["ref"]["W_comb"], precision=HIGHEST)
              + params["ref"]["b_comb"]).reshape(batch, seq, out_feat)
    assert jnp.allclose(ref, folded, atol=1e-3, rtol=1e-3)

    assert out.shape == (batch, seq, out_feat)
    assert not bool(jnp.isnan(out).any())
    # bf16 weight / feature streams -> quantization-aware tolerance vs f32 ref.
    assert jnp.allclose(out, ref, atol=tol, rtol=tol), \
        float(jnp.max(jnp.abs(out - ref)))


if __name__ == "__main__":
    key = jax.random.PRNGKey(0)
    k_small, k_large = jax.random.split(key)

    # Small shapes consistent with the module: hits the single-block fast path.
    _run_case(k_small, batch=2, seq=8, feat_in=4, d_model=16, nhead=2,
              out_feat=8, tol=5e-2)
    # Larger feature dim: exercises the tiled K-reduction / megacore path
    # (d_feat ~ 18.7K -> K padded to a 512 multiple, tk=512, 2 N blocks).
    _run_case(k_large, batch=2, seq=8, feat_in=24, d_model=16, nhead=2,
              out_feat=32, tol=5e-2)

    print("KERNEL_OK")
</pallas_src>

<mosaic_0001>
module attributes {stable_mosaic.version = 11 : i64} {
  func.func @_taylor_single_block_kernel(%arg0: i32, %arg1: memref<8x640xbf16, #tpu.memory_space<vmem>>, %arg2: memref<640x128xbf16, #tpu.memory_space<vmem>>, %arg3: memref<1x128xf32, #tpu.memory_space<vmem>>, %arg4: memref<8x128xf32, #tpu.memory_space<vmem>>) attributes {dimension_semantics = [#tpu.dimension_semantics<arbitrary>], iteration_bounds = array<i64: 1>, scalar_prefetch = 0 : i64, scratch_operands = 0 : i64, tpu.core_type = #tpu.core_type<tc>, window_params = [{pipeline_mode = #tpu.pipeline_mode<synchronous>, transform_indices = @transform_0, window_bounds = array<i64: 8, 640>}, {pipeline_mode = #tpu.pipeline_mode<synchronous>, transform_indices = @transform_1, window_bounds = array<i64: 640, 128>}, {pipeline_mode = #tpu.pipeline_mode<synchronous>, transform_indices = @transform_2, window_bounds = array<i64: 1, 128>}, {pipeline_mode = #tpu.pipeline_mode<synchronous>, transform_indices = @transform_3, window_bounds = array<i64: 8, 128>}]} {
    %c0 = arith.constant 0 : index
    %c0_0 = arith.constant 0 : index
    %0 = vector.load %arg1[%c0, %c0_0] : memref<8x640xbf16, #tpu.memory_space<vmem>>, vector<8x640xbf16>
    %c0_1 = arith.constant 0 : index
    %c0_2 = arith.constant 0 : index
    %1 = vector.load %arg2[%c0_1, %c0_2] : memref<640x128xbf16, #tpu.memory_space<vmem>>, vector<640x128xbf16>
    %cst = arith.constant dense<0.000000e+00> : vector<8x128xf32>
    %2 = tpu.matmul %0, %1, %cst {dimension_numbers = #tpu.dot_dimension_numbers<[1], [0], [0], [1], [0, 0, 1, 1], [], []>} : vector<8x640xbf16>, vector<640x128xbf16>, vector<8x128xf32> -> vector<8x128xf32>
    %c0_3 = arith.constant 0 : index
    %c0_4 = arith.constant 0 : index
    %3 = vector.load %arg3[%c0_3, %c0_4] : memref<1x128xf32, #tpu.memory_space<vmem>>, vector<1x128xf32>
    %4 = vector.broadcast %3 : vector<1x128xf32> to vector<8x128xf32>
    %5 = arith.addf %2, %4 : vector<8x128xf32>
    %c0_5 = arith.constant 0 : index
    %c0_6 = arith.constant 0 : index
    %6 = vector.load %arg4[%c0_5, %c0_6] : memref<8x128xf32, #tpu.memory_space<vmem>>, vector<8x128xf32>
    tpu.vector_store %arg4[%c0_5, %c0_6], %5 {strides = array<i32>} : memref<8x128xf32, #tpu.memory_space<vmem>>, vector<8x128xf32>,
    return
  }
  func.func @transform_0(%arg0: i32) -> (i32, i32) {
    %c0_i32 = arith.constant 0 : i32
    %c0_i32_0 = arith.constant 0 : i32
    %c0_i32_1 = arith.constant 0 : i32
    return %c0_i32, %c0_i32_0 : i32, i32
  }
  func.func @transform_1(%arg0: i32) -> (i32, i32) {
    %c0_i32 = arith.constant 0 : i32
    %c0_i32_0 = arith.constant 0 : i32
    %c0_i32_1 = arith.constant 0 : i32
    return %c0_i32, %c0_i32_0 : i32, i32
  }
  func.func @transform_2(%arg0: i32) -> (i32, i32) {
    %c0_i32 = arith.constant 0 : i32
    %c0_i32_0 = arith.constant 0 : i32
    %c0_i32_1 = arith.constant 0 : i32
    return %c0_i32, %c0_i32_0 : i32, i32
  }
  func.func @transform_3(%arg0: i32) -> (i32, i32) {
    %c0_i32 = arith.constant 0 : i32
    %c0_i32_0 = arith.constant 0 : i32
    %c0_i32_1 = arith.constant 0 : i32
    return %c0_i32, %c0_i32_0 : i32, i32
  }
}

</mosaic_0001>

<llo_original>
// kernel: taylor_self_attention.1
$region0: #{taylor_self_attention.1}
  #allocation0 [shape = 'u32[]', space=smem, size = 0x4, offset = 0x4, fixed_abs, tag = 'smem constant byte address 0x4 - core index']
  #allocation1 [shape = 'u32[144,128]{1,0:T(1,128)}', space=vmem, size = 0x12000, scoped, tag = 'internal scratch']
  %s0 = inlined_call_operand.vmem [shape: bf16[8,640], index: 0, kind: input, shape index: {}]
  %s1 = inlined_call_operand.vmem [shape: bf16[640,128], index: 1, kind: input, shape index: {}]
  %s2 = inlined_call_operand.vmem [shape: f32[1,128], index: 2, kind: input, shape index: {}]
  %s3 = inlined_call_operand.vmem [shape: f32[8,128], index: 3, kind: output, shape index: {}]
  %s4 = sld [smem:[#allocation0]]
  $region22: #{taylor_self_attention.1} parent=0
    _
  %s6 = ssub.s32 1, %s4
  %s7 = scalar_select 0, %s6, %s4
  // Predicated region
  $region2: #{taylor_self_attention.1} parent=0 // pred_check
    _
  $region3: #{taylor_self_attention.1} parent=0 // pred_check_branch
    %9 = sbr.rel (0) target = $region5
  $region4: #{taylor_self_attention.1} parent=0 // pred_region
    _
  $region5: #{taylor_self_attention.1} parent=0 // pred_fallthru
    _
  // Predicated region
  $region6: #{taylor_self_attention.1} parent=0 // pred_check
    _
  $region7: #{taylor_self_attention.1} parent=0 // pred_check_branch
    %11 = sbr.rel (0) target = $region9
  $region8: #{taylor_self_attention.1} parent=0 // pred_region
    _
  $region9: #{taylor_self_attention.1} parent=0 // pred_fallthru
    _
  // Predicated region
  $region10: #{taylor_self_attention.1} parent=0 // pred_check
    _
  $region11: #{taylor_self_attention.1} parent=0 // pred_check_branch
    %13 = sbr.rel (0) target = $region13
  $region12: #{taylor_self_attention.1} parent=0 // pred_region
    _
  $region13: #{taylor_self_attention.1} parent=0 // pred_fallthru
    _
  %v15 = vld [vmem:[%s0] sm:$0xff]
  %v16 = vld [vmem:[%s0 + $0x8] sm:$0xff]
  %v17 = vld [vmem:[%s0 + $0x10] sm:$0xf]
  %v18 = vld [vmem:[%s1] sm:$0xf]
  %v19 = vld [vmem:[%s1 + $0x4] sm:$0xf]
  %v20 = vld [vmem:[%s1 + $0x8] sm:$0xf]
  %v21 = vld [vmem:[%s1 + $0xc] sm:$0xf]
  %v22 = vld [vmem:[%s1 + $0x10] sm:$0xf]
  %v23 = vld [vmem:[%s1 + $0x14] sm:$0xf]
  %v24 = vld [vmem:[%s1 + $0x18] sm:$0xf]
  %v25 = vld [vmem:[%s1 + $0x1c] sm:$0xf]
  %v26 = vld [vmem:[%s1 + $0x20] sm:$0xf]
  %v27 = vld [vmem:[%s1 + $0x24] sm:$0xf]
  %v28 = vld [vmem:[%s1 + $0x28] sm:$0xf]
  %v29 = vld [vmem:[%s1 + $0x2c] sm:$0xf]
  %v30 = vld [vmem:[%s1 + $0x30] sm:$0xf]
  %v31 = vld [vmem:[%s1 + $0x34] sm:$0xf]
  %v32 = vld [vmem:[%s1 + $0x38] sm:$0xf]
  %v33 = vld [vmem:[%s1 + $0x3c] sm:$0xf]
  %v34 = vld [vmem:[%s1 + $0x40] sm:$0xf]
  %v35 = vld [vmem:[%s1 + $0x44] sm:$0xf]
  %v36 = vld [vmem:[%s1 + $0x48] sm:$0xf]
  %v37 = vld [vmem:[%s1 + $0x4c] sm:$0xf]
  %v38 = vld [vmem:[%s1 + $0x50] sm:$0xf]
  %v39 = vld [vmem:[%s1 + $0x54] sm:$0xf]
  %v40 = vld [vmem:[%s1 + $0x58] sm:$0xf]
  %v41 = vld [vmem:[%s1 + $0x5c] sm:$0xf]
  %v42 = vld [vmem:[%s1 + $0x60] sm:$0xf]
  %v43 = vld [vmem:[%s1 + $0x64] sm:$0xf]
  %v44 = vld [vmem:[%s1 + $0x68] sm:$0xf]
  %v45 = vld [vmem:[%s1 + $0x6c] sm:$0xf]
  %v46 = vld [vmem:[%s1 + $0x70] sm:$0xf]
  %v47 = vld [vmem:[%s1 + $0x74] sm:$0xf]
  %v48 = vld [vmem:[%s1 + $0x78] sm:$0xf]
  %v49 = vld [vmem:[%s1 + $0x7c] sm:$0xf]
  %v50 = vld [vmem:[%s1 + $0x80] sm:$0xf]
  %v51 = vld [vmem:[%s1 + $0x84] sm:$0xf]
  %v52 = vld [vmem:[%s1 + $0x88] sm:$0xf]
  %v53 = vld [vmem:[%s1 + $0x8c] sm:$0xf]
  %v54 = vld [vmem:[%s1 + $0x90] sm:$0xf]
  %v55 = vld [vmem:[%s1 + $0x94] sm:$0xf]
  %v56 = vld [vmem:[%s1 + $0x98] sm:$0xf]
  %v57 = vld [vmem:[%s1 + $0x9c] sm:$0xf]
  %v58 = vld [vmem:[%s1 + $0xa0] sm:$0xf]
  %v59 = vld [vmem:[%s1 + $0xa4] sm:$0xf]
  %v60 = vld [vmem:[%s1 + $0xa8] sm:$0xf]
  %v61 = vld [vmem:[%s1 + $0xac] sm:$0xf]
  %v62 = vld [vmem:[%s1 + $0xb0] sm:$0xf]
  %v63 = vld [vmem:[%s1 + $0xb4] sm:$0xf]
  %v64 = vld [vmem:[%s1 + $0xb8] sm:$0xf]
  %v65 = vld [vmem:[%s1 + $0xbc] sm:$0xf]
  %v66 = vld [vmem:[%s1 + $0xc0] sm:$0xf]
  %v67 = vld [vmem:[%s1 + $0xc4] sm:$0xf]
  %v68 = vld [vmem:[%s1 + $0xc8] sm:$0xf]
  %v69 = vld [vmem:[%s1 + $0xcc] sm:$0xf]
  %v70 = vld [vmem:[%s1 + $0xd0] sm:$0xf]
  %v71 = vld [vmem:[%s1 + $0xd4] sm:$0xf]
  %v72 = vld [vmem:[%s1 + $0xd8] sm:$0xf]
  %v73 = vld [vmem:[%s1 + $0xdc] sm:$0xf]
  %v74 = vld [vmem:[%s1 + $0xe0] sm:$0xf]
  %v75 = vld [vmem:[%s1 + $0xe4] sm:$0xf]
  %v76 = vld [vmem:[%s1 + $0xe8] sm:$0xf]
  %v77 = vld [vmem:[%s1 + $0xec] sm:$0xf]
  %v78 = vld [vmem:[%s1 + $0xf0] sm:$0xf]
  %v79 = vld [vmem:[%s1 + $0xf4] sm:$0xf]
  %v80 = vld [vmem:[%s1 + $0xf8] sm:$0xf]
  %v81 = vld [vmem:[%s1 + $0xfc] sm:$0xf]
  %v82 = vld [vmem:[%s1 + $0x100] sm:$0xf]
  %v83 = vld [vmem:[%s1 + $0x104] sm:$0xf]
  %v84 = vld [vmem:[%s1 + $0x108] sm:$0xf]
  %v85 = vld [vmem:[%s1 + $0x10c] sm:$0xf]
  %v86 = vld [vmem:[%s1 + $0x110] sm:$0xf]
  %v87 = vld [vmem:[%s1 + $0x114] sm:$0xf]
  %v88 = vld [vmem:[%s1 + $0x118] sm:$0xf]
  %v89 = vld [vmem:[%s1 + $0x11c] sm:$0xf]
  %v90 = vld [vmem:[%s1 + $0x120] sm:$0xf]
  %v91 = vld [vmem:[%s1 + $0x124] sm:$0xf]
  %v92 = vld [vmem:[%s1 + $0x128] sm:$0xf]
  %v93 = vld [vmem:[%s1 + $0x12c] sm:$0xf]
  %v94 = vld [vmem:[%s1 + $0x130] sm:$0xf]
  %v95 = vld [vmem:[%s1 + $0x134] sm:$0xf]
  %v96 = vld [vmem:[%s1 + $0x138] sm:$0xf]
  %v97 = vld [vmem:[%s1 + $0x13c] sm:$0xf]
  %v98 = vld [vmem:[%s2] sm:$0x1]
  %v100 = vlaneseq
  %v101 = vshrl.u32 %v100, 7
  %v102 = vsub.s32 0, %v101
  %v103 = vrot.slane %v98, %v102
  %v108 = vunpack.c.l.b16 %v15
  %v109 = vunpack.c.h.b16 %v15
  %v110 = vunpack.c.l.b16 %v16
  %v111 = vunpack.c.h.b16 %v16
  %v112 = vunpack.c.l.b16 %v17
  %v113 = vpack.c.b16 %v108, %v108
  %v114 = vpack.c.b16 %v109, %v109
  %v115 = vpack.c.b16 %v110, %v110
  %v116 = vpack.c.b16 %v111, %v111
  %v117 = vpack.c.b16 %v112, %v112
  %v203 = vunpack.c.l.b16 %v18
  %v204 = vunpack.c.l.b16 %v19
  %v205 = vunpack.c.l.b16 %v20
  %v206 = vunpack.c.l.b16 %v21
  %v207 = vunpack.c.l.b16 %v22
  %v208 = vunpack.c.l.b16 %v23
  %v209 = vunpack.c.l.b16 %v24
  %v210 = vunpack.c.l.b16 %v25
  %v211 = vunpack.c.l.b16 %v26
  %v212 = vunpack.c.l.b16 %v27
  %v213 = vunpack.c.l.b16 %v28
  %v214 = vunpack.c.l.b16 %v29
  %v215 = vunpack.c.l.b16 %v30
  %v216 = vunpack.c.l.b16 %v31
  %v217 = vunpack.c.l.b16 %v32
  %v218 = vunpack.c.l.b16 %v33
  %v219 = vunpack.c.l.b16 %v34
  %v220 = vunpack.c.l.b16 %v35
  %v221 = vunpack.c.l.b16 %v36
  %v222 = vunpack.c.l.b16 %v37
  %v223 = vunpack.c.l.b16 %v38
  %v224 = vunpack.c.l.b16 %v39
  %v225 = vunpack.c.l.b16 %v40
  %v226 = vunpack.c.l.b16 %v41
  %v227 = vunpack.c.l.b16 %v42
  %v228 = vunpack.c.l.b16 %v43
  %v229 = vunpack.c.l.b16 %v44
  %v230 = vunpack.c.l.b16 %v45
  %v231 = vunpack.c.l.b16 %v46
  %v232 = vunpack.c.l.b16 %v47
  %v233 = vunpack.c.l.b16 %v48
  %v234 = vunpack.c.l.b16 %v49
  %v235 = vunpack.c.l.b16 %v50
  %v236 = vunpack.c.l.b16 %v51
  %v237 = vunpack.c.l.b16 %v52
  %v238 = vunpack.c.l.b16 %v53
  %v239 = vunpack.c.l.b16 %v54
  %v240 = vunpack.c.l.b16 %v55
  %v241 = vunpack.c.l.b16 %v56
  %v242 = vunpack.c.l.b16 %v57
  %v243 = vunpack.c.l.b16 %v58
  %v244 = vunpack.c.l.b16 %v59
  %v245 = vunpack.c.l.b16 %v60
  %v246 = vunpack.c.l.b16 %v61
  %v247 = vunpack.c.l.b16 %v62
  %v248 = vunpack.c.l.b16 %v63
  %v249 = vunpack.c.l.b16 %v64
  %v250 = vunpack.c.l.b16 %v65
  %v251 = vunpack.c.l.b16 %v66
  %v252 = vunpack.c.l.b16 %v67
  %v253 = vunpack.c.l.b16 %v68
  %v254 = vunpack.c.l.b16 %v69
  %v255 = vunpack.c.l.b16 %v70
  %v256 = vunpack.c.l.b16 %v71
  %v257 = vunpack.c.l.b16 %v72
  %v258 = vunpack.c.l.b16 %v73
  %v259 = vunpack.c.l.b16 %v74
  %v260 = vunpack.c.l.b16 %v75
  %v261 = vunpack.c.l.b16 %v76
  %v262 = vunpack.c.l.b16 %v77
  %v263 = vunpack.c.l.b16 %v78
  %v264 = vunpack.c.l.b16 %v79
  %v265 = vunpack.c.l.b16 %v80
  %v266 = vunpack.c.l.b16 %v81
  %v267 = vunpack.c.l.b16 %v82
  %v268 = vunpack.c.l.b16 %v83
  %v269 = vunpack.c.l.b16 %v84
  %v270 = vunpack.c.l.b16 %v85
  %v271 = vunpack.c.l.b16 %v86
  %v272 = vunpack.c.l.b16 %v87
  %v273 = vunpack.c.l.b16 %v88
  %v274 = vunpack.c.l.b16 %v89
  %v275 = vunpack.c.l.b16 %v90
  %v276 = vunpack.c.l.b16 %v91
  %v277 = vunpack.c.l.b16 %v92
  %v278 = vunpack.c.l.b16 %v93
  %v279 = vunpack.c.l.b16 %v94
  %v280 = vunpack.c.l.b16 %v95
  %v281 = vunpack.c.l.b16 %v96
  %v282 = vunpack.c.l.b16 %v97
  %v283 = vpack.c.b16 %v204, %v203
  %v284 = vpack.c.b16 %v206, %v205
  %v285 = vpack.c.b16 %v208, %v207
  %v286 = vpack.c.b16 %v210, %v209
  %v287 = vpack.c.b16 %v212, %v211
  %v288 = vpack.c.b16 %v214, %v213
  %v289 = vpack.c.b16 %v216, %v215
  %v290 = vpack.c.b16 %v218, %v217
  %v291 = vpack.c.b16 %v220, %v219
  %v292 = vpack.c.b16 %v222, %v221
  %v293 = vpack.c.b16 %v224, %v223
  %v294 = vpack.c.b16 %v226, %v225
  %v295 = vpack.c.b16 %v228, %v227
  %v296 = vpack.c.b16 %v230, %v229
  %v297 = vpack.c.b16 %v232, %v231
  %v298 = vpack.c.b16 %v234, %v233
  %v299 = vpack.c.b16 %v236, %v235
  %v300 = vpack.c.b16 %v238, %v237
  %v301 = vpack.c.b16 %v240, %v239
  %v302 = vpack.c.b16 %v242, %v241
  %v303 = vpack.c.b16 %v244, %v243
  %v304 = vpack.c.b16 %v246, %v245
  %v305 = vpack.c.b16 %v248, %v247
  %v306 = vpack.c.b16 %v250, %v249
  %v307 = vpack.c.b16 %v252, %v251
  %v308 = vpack.c.b16 %v254, %v253
  %v309 = vpack.c.b16 %v256, %v255
  %v310 = vpack.c.b16 %v258, %v257
  %v311 = vpack.c.b16 %v260, %v259
  %v312 = vpack.c.b16 %v262, %v261
  %v313 = vpack.c.b16 %v264, %v263
  %v314 = vpack.c.b16 %v266, %v265
  %v315 = vpack.c.b16 %v268, %v267
  %v316 = vpack.c.b16 %v270, %v269
  %v317 = vpack.c.b16 %v272, %v271
  %v318 = vpack.c.b16 %v274, %v273
  %v319 = vpack.c.b16 %v276, %v275
  %v320 = vpack.c.b16 %v278, %v277
  %v321 = vpack.c.b16 %v280, %v279
  %v322 = vpack.c.b16 %v282, %v281
  %363 = vmatprep.subr.bf16.mxu0 0
  %364 = vmatpush1.bf16.msra.mxu0 %v290
  %365 = vmatprep.subr.bf16.mxu0 0
  %366 = vmatpush1.bf16.msra.mxu0 %v289
  %367 = vmatprep.subr.bf16.mxu0 0
  %368 = vmatpush1.bf16.msra.mxu0 %v288
  %369 = vmatprep.subr.bf16.mxu0 0
  %370 = vmatpush1.bf16.msra.mxu0 %v287
  %371 = vmatprep.subr.bf16.mxu0 0
  %372 = vmatpush1.bf16.msra.mxu0 %v286
  %373 = vmatprep.subr.bf16.mxu0 0
  %374 = vmatpush1.bf16.msra.mxu0 %v285
  %375 = vmatprep.subr.bf16.mxu0 0
  %376 = vmatpush1.bf16.msra.mxu0 %v284
  %377 = vmatprep.subr.bf16.mxu0 0
  %378 = vmatpush1.bf16.msra.mxu0 %v283
  %379 = vmatprep.subr.bf16.mxu0 0
  %380 = vmatpush2.bf16.msra.mxu0 %v298
  %381 = vmatprep.subr.bf16.mxu0 0
  %382 = vmatpush2.bf16.msra.mxu0 %v297
  %383 = vmatprep.subr.bf16.mxu0 0
  %384 = vmatpush2.bf16.msra.mxu0 %v296
  %385 = vmatprep.subr.bf16.mxu0 0
  %386 = vmatpush2.bf16.msra.mxu0 %v295
  %387 = vmatprep.subr.bf16.mxu0 0
  %388 = vmatpush2.bf16.msra.mxu0 %v294
  %389 = vmatprep.subr.bf16.mxu0 0
  %390 = vmatpush2.bf16.msra.mxu0 %v293
  %391 = vmatprep.subr.bf16.mxu0 0
  %392 = vmatpush2.bf16.msra.mxu0 %v292
  %393 = vmatprep.subr.bf16.mxu0 0
  %394 = vmatpush2.bf16.msra.mxu0 %v291
  %395 = vmatprep.mubr.bf16.mxu0 %v114
  %396 = vmatmul.mubr.bf16.gmra.mxu0 %v113
  %v397 = vpop.f32.mrf.mxu0
  %v398 = vadd.f32 %v103, %v397
  %v399 = vpop.f32.mrf.mxu0
  %v400 = vpop.f32.mrf.mxu0
  %v401 = vpop.f32.mrf.mxu0
  %402 = vdwg.mxu0
  %403 = vmatprep.subr.bf16.mxu0 0
  %404 = vmatpush1.bf16.msra.mxu0 %v306
  %405 = vmatprep.subr.bf16.mxu0 0
  %406 = vmatpush1.bf16.msra.mxu0 %v305
  %407 = vmatprep.subr.bf16.mxu0 0
  %408 = vmatpush1.bf16.msra.mxu0 %v304
  %409 = vmatprep.subr.bf16.mxu0 0
  %410 = vmatpush1.bf16.msra.mxu0 %v303
  %411 = vmatprep.subr.bf16.mxu0 0
  %412 = vmatpush1.bf16.msra.mxu0 %v302
  %413 = vmatprep.subr.bf16.mxu0 0
  %414 = vmatpush1.bf16.msra.mxu0 %v301
  %415 = vmatprep.subr.bf16.mxu0 0
  %416 = vmatpush1.bf16.msra.mxu0 %v300
  %417 = vmatprep.subr.bf16.mxu0 0
  %418 = vmatpush1.bf16.msra.mxu0 %v299
  %419 = vmatprep.subr.bf16.mxu0 0
  %420 = vmatpush2.bf16.msra.mxu0 %v314
  %421 = vmatprep.subr.bf16.mxu0 0
  %422 = vmatpush2.bf16.msra.mxu0 %v313
  %423 = vmatprep.subr.bf16.mxu0 0
  %424 = vmatpush2.bf16.msra.mxu0 %v312
  %425 = vmatprep.subr.bf16.mxu0 0
  %426 = vmatpush2.bf16.msra.mxu0 %v311
  %427 = vmatprep.subr.bf16.mxu0 0
  %428 = vmatpush2.bf16.msra.mxu0 %v310
  %429 = vmatprep.subr.bf16.mxu0 0
  %430 = vmatpush2.bf16.msra.mxu0 %v309
  %431 = vmatprep.subr.bf16.mxu0 0
  %432 = vmatpush2.bf16.msra.mxu0 %v308
  %433 = vmatprep.subr.bf16.mxu0 0
  %434 = vmatpush2.bf16.msra.mxu0 %v307
  %435 = vmatprep.mubr.bf16.mxu0 %v116
  %436 = vmatmul.mubr.bf16.gmra.mxu0 %v115
  %v437 = vpop.f32.mrf.mxu0
  %v438 = vadd.f32 %v398, %v437
  %v439 = vpop.f32.mrf.mxu0
  %v440 = vpop.f32.mrf.mxu0
  %v441 = vpop.f32.mrf.mxu0
  %442 = vdwg.mxu0
  %443 = vmatprep.subr.bf16.mxu0 0
  %444 = vmatpush1.bf16.msra.mxu0 %v322
  %445 = vmatprep.subr.bf16.mxu0 0
  %446 = vmatpush1.bf16.msra.mxu0 %v321
  %447 = vmatprep.subr.bf16.mxu0 0
  %448 = vmatpush1.bf16.msra.mxu0 %v320
  %449 = vmatprep.subr.bf16.mxu0 0
  %450 = vmatpush1.bf16.msra.mxu0 %v319
  %451 = vmatprep.subr.bf16.mxu0 0
  %452 = vmatpush1.bf16.msra.mxu0 %v318
  %453 = vmatprep.subr.bf16.mxu0 0
  %454 = vmatpush1.bf16.msra.mxu0 %v317
  %455 = vmatprep.subr.bf16.mxu0 0
  %456 = vmatpush1.bf16.msra.mxu0 %v316
  %457 = vmatprep.subr.bf16.mxu0 0
  %458 = vmatpush1.bf16.msra.mxu0 %v315
  %459 = vmatprep.subr.bf16.mxu0 0
  %460 = vmatpush2.bf16.msra.mxu0 0
  %461 = vmatprep.subr.bf16.mxu0 0
  %462 = vmatpush2.bf16.msra.mxu0 0
  %463 = vmatprep.subr.bf16.mxu0 0
  %464 = vmatpush2.bf16.msra.mxu0 0
  %465 = vmatprep.subr.bf16.mxu0 0
  %466 = vmatpush2.bf16.msra.mxu0 0
  %467 = vmatprep.subr.bf16.mxu0 0
  %468 = vmatpush2.bf16.msra.mxu0 0
  %469 = vmatprep.subr.bf16.mxu0 0
  %470 = vmatpush2.bf16.msra.mxu0 0
  %471 = vmatprep.subr.bf16.mxu0 0
  %472 = vmatpush2.bf16.msra.mxu0 0
  %473 = vmatprep.subr.bf16.mxu0 0
  %474 = vmatpush2.bf16.msra.mxu0 0
  %475 = vmatprep.mubr.bf16.mxu0 0
  %476 = vmatmul.mubr.bf16.gmra.mxu0 %v117
  %v477 = vpop.f32.mrf.mxu0
  %v478 = vadd.f32 %v438, %v477
  %v479 = vpop.f32.mrf.mxu0
  %v480 = vpop.f32.mrf.mxu0
  %v481 = vpop.f32.mrf.mxu0
  %482 = vdwg.mxu0
  %483 = vst [vmem:[%s3] sm:$0xff] %v478
  // Predicated region
  $region14: #{taylor_self_attention.1} parent=0 // pred_check
    _
  $region15: #{taylor_self_attention.1} parent=0 // pred_check_branch
    %485 = sbr.rel (0) target = $region17
  $region16: #{taylor_self_attention.1} parent=0 // pred_region
    _
  $region17: #{taylor_self_attention.1} parent=0 // pred_fallthru
    _
  // Predicated region
  $region18: #{taylor_self_attention.1} parent=0 // pred_check
    _
  $region19: #{taylor_self_attention.1} parent=0 // pred_check_branch
    %487 = sbr.rel (0) target = $region21
  $region20: #{taylor_self_attention.1} parent=0 // pred_region
    _
  $region21: #{taylor_self_attention.1} parent=0 // pred_fallthru
    _

</llo_original>
